<compile_context>
chip_gen: v7x
topology: tpu7x:2x2x1
jax: 0.10.0
libtpu: 0.0.40
codegen_flags: <defaults>
</compile_context>

<pallas_src>
import jax
import jax.numpy as jnp
from jax.experimental import pallas as pl
from jax.experimental.pallas import tpu as pltpu

NUM_INPUTS = 1
NUM_OUTPUTS = 2
NUM_LAYERS = 4
H = 10
HP = 16            # H padded up for sublane-friendly tiles


def _silu(x):
    # sigmoid = 1 / (1 + exp(-x)): exp -> EUP, approx reciprocal -> EUP vrcp,
    # one Newton-Raphson step on the VPU restores ~f32 accuracy cheaply.
    d = 1.0 + jnp.exp(-x)
    r = pl.reciprocal(d, approx=True)
    r = r * (2.0 - d * r)
    return x * r


def mlp_kernel(x_ref, w0_ref, b0_ref, wh_ref, bh_ref, wf_ref, bf_ref, o_ref):
    # x_ref: (NUM_INPUTS, TM) — batch on lanes, features on sublanes.
    x = x_ref[...]                                          # (1, TM)

    # Layer 0 (K = 1): broadcast multiply-add on the VPU (outer product),
    # no MXU push for a single-element contraction.
    h = _silu(w0_ref[...] * x + b0_ref[...])                # (HP, TM)

    # Hidden layers 1..NUM_LAYERS-1: (HP, HP) @ (HP, TM) on the MXU.
    for l in range(NUM_LAYERS - 1):
        h = jnp.dot(wh_ref[l], h, preferred_element_type=jnp.float32) + bh_ref[l]
        h = _silu(h)

    # Final layer: (NUM_OUTPUTS, HP) @ (HP, TM) -> lane-dense output tile.
    out = jnp.dot(wf_ref[...], h, preferred_element_type=jnp.float32) + bf_ref[...]
    o_ref[...] = out.astype(o_ref.dtype)                    # (NUM_OUTPUTS, TM)


def _fold_weight_norm(v, g):
    # weight_norm with dim=0: W = g * v / ||v||, norm over all dims except 0.
    norm = jnp.sqrt(jnp.sum(v * v, axis=1, keepdims=True))
    return g * v / norm


def _pack_params(params):
    """Fold weight-norm and pad/pack parameters into kernel-friendly slabs."""
    # Layer 0: (H, NUM_INPUTS) -> (HP, NUM_INPUTS), zero-padded rows.
    w0 = _fold_weight_norm(params["layer0_v"], params["layer0_g"])
    w0 = jnp.zeros((HP, NUM_INPUTS), jnp.float32).at[:H, :].set(w0)
    b0 = jnp.zeros((HP, 1), jnp.float32).at[:H, 0].set(params["layer0_b"])

    # Hidden layers packed into one slab each for weights and biases.
    wh = jnp.zeros((NUM_LAYERS - 1, HP, HP), jnp.float32)
    bh = jnp.zeros((NUM_LAYERS - 1, HP, 1), jnp.float32)
    for l in range(1, NUM_LAYERS):
        w = _fold_weight_norm(params[f"layer{l}_v"], params[f"layer{l}_g"])
        wh = wh.at[l - 1, :H, :H].set(w)
        bh = bh.at[l - 1, :H, 0].set(params[f"layer{l}_b"])

    # Final layer: (NUM_OUTPUTS, H) -> (NUM_OUTPUTS, HP), zero-padded columns.
    wf = jnp.zeros((NUM_OUTPUTS, HP), jnp.float32).at[:, :H].set(params["final_w"])
    bf = params["final_b"].reshape(NUM_OUTPUTS, 1).astype(jnp.float32)
    return w0, b0, wh, bh, wf, bf


def net_forward(x, params, *, tm=512):
    """x: (N, NUM_INPUTS) float32. Returns (N, NUM_OUTPUTS) float32."""
    n = x.shape[0]
    n_pad = pl.cdiv(n, tm) * tm

    # Batch on lanes: (NUM_INPUTS, n_pad), zero-padded (padding is sliced off).
    xt = jnp.zeros((NUM_INPUTS, n_pad), jnp.float32).at[:, :n].set(x.T)

    w0, b0, wh, bh, wf, bf = _pack_params(params)

    def full(shape):
        return pl.BlockSpec(shape, lambda i, _s=shape: (0,) * len(_s))

    in_specs = [
        pl.BlockSpec((NUM_INPUTS, tm), lambda i: (0, i)),
        full(w0.shape), full(b0.shape),
        full(wh.shape), full(bh.shape),
        full(wf.shape), full(bf.shape),
    ]
    out_spec = pl.BlockSpec((NUM_OUTPUTS, tm), lambda i: (0, i))

    flops_per_sample = 2 * (HP * NUM_INPUTS
                            + (NUM_LAYERS - 1) * HP * HP
                            + NUM_OUTPUTS * HP)
    cost = pl.CostEstimate(
        flops=flops_per_sample * n_pad,
        transcendentals=NUM_LAYERS * HP * n_pad,
        bytes_accessed=4 * (NUM_INPUTS + NUM_OUTPUTS) * n_pad,
    )

    out_t = pl.pallas_call(
        mlp_kernel,
        out_shape=jax.ShapeDtypeStruct((NUM_OUTPUTS, n_pad), jnp.float32),
        grid_spec=pltpu.PrefetchScalarGridSpec(
            num_scalar_prefetch=0,
            grid=(n_pad // tm,),
            in_specs=in_specs,
            out_specs=out_spec,
        ),
        compiler_params=pltpu.CompilerParams(
            dimension_semantics=("parallel",)),
        cost_estimate=cost,
    )(xt, w0, b0, wh, bh, wf, bf)

    return out_t[:, :n].T


def net_forward_ref(x, params):
    """Pure-JAX reference (mirrors the PyTorch forward)."""
    def silu(v):
        return v * jax.nn.sigmoid(v)
    h = x
    for i in range(NUM_LAYERS):
        v = params[f"layer{i}_v"]
        g = params[f"layer{i}_g"]
        b = params[f"layer{i}_b"]
        norm = jnp.sqrt(jnp.sum(v * v, axis=1, keepdims=True))
        w = g * v / norm
        h = silu(h @ w.T + b)
    return h @ params["final_w"].T + params["final_b"]


def init_params(key):
    params = {}
    dims_in = [NUM_INPUTS] + [H] * (NUM_LAYERS - 1)
    for i, din in enumerate(dims_in):
        key, k1, k2, k3 = jax.random.split(key, 4)
        v = jax.random.normal(k1, (H, din), jnp.float32) * 0.5
        # weight_norm init: g = ||v|| along dims != 0
        g = jnp.sqrt(jnp.sum(v * v, axis=1, keepdims=True))
        g = g * (1.0 + 0.1 * jax.random.normal(k2, g.shape, jnp.float32))
        b = jax.random.normal(k3, (H,), jnp.float32) * 0.1
        params[f"layer{i}_v"] = v
        params[f"layer{i}_g"] = g
        params[f"layer{i}_b"] = b
    key, k1, k2 = jax.random.split(key, 3)
    params["final_w"] = jax.random.normal(k1, (NUM_OUTPUTS, H), jnp.float32) * 0.5
    params["final_b"] = jax.random.normal(k2, (NUM_OUTPUTS,), jnp.float32) * 0.1
    return params


if __name__ == "__main__":
    key = jax.random.PRNGKey(0)
    kp, kx = jax.random.split(key)
    params = init_params(kp)

    N = 1000                       # not a multiple of tm -> exercises padding
    x = jax.random.normal(kx, (N, NUM_INPUTS), jnp.float32)

    out = net_forward(x, params, tm=512)   # grid = 2 lane-tiles of 512 samples
    out = jax.block_until_ready(out)

    ref = net_forward_ref(x, params)
    assert out.shape == (N, NUM_OUTPUTS)
    err = jnp.max(jnp.abs(out - ref))
    assert jnp.allclose(out, ref, atol=1e-4, rtol=1e-4), f"max abs err = {err}"

    print("KERNEL_OK")
</pallas_src>

<mosaic_0001>
module attributes {stable_mosaic.version = 11 : i64} {
  func.func @mlp_kernel(%arg0: i32, %arg1: memref<1x512xf32, #tpu.memory_space<vmem>>, %arg2: memref<16x1xf32, #tpu.memory_space<vmem>>, %arg3: memref<16x1xf32, #tpu.memory_space<vmem>>, %arg4: memref<3x16x16xf32, #tpu.memory_space<vmem>>, %arg5: memref<3x16x1xf32, #tpu.memory_space<vmem>>, %arg6: memref<2x16xf32, #tpu.memory_space<vmem>>, %arg7: memref<2x1xf32, #tpu.memory_space<vmem>>, %arg8: memref<2x512xf32, #tpu.memory_space<vmem>>) attributes {dimension_semantics = [#tpu.dimension_semantics<parallel>], iteration_bounds = array<i64: 2>, scalar_prefetch = 0 : i64, scratch_operands = 0 : i64, tpu.core_type = #tpu.core_type<tc>, window_params = [{transform_indices = @transform_0, window_bounds = array<i64: 1, 512>}, {pipeline_mode = #tpu.pipeline_mode<synchronous>, transform_indices = @transform_1, window_bounds = array<i64: 16, 1>}, {pipeline_mode = #tpu.pipeline_mode<synchronous>, transform_indices = @transform_2, window_bounds = array<i64: 16, 1>}, {pipeline_mode = #tpu.pipeline_mode<synchronous>, transform_indices = @transform_3, window_bounds = array<i64: 3, 16, 16>}, {pipeline_mode = #tpu.pipeline_mode<synchronous>, transform_indices = @transform_4, window_bounds = array<i64: 3, 16, 1>}, {pipeline_mode = #tpu.pipeline_mode<synchronous>, transform_indices = @transform_5, window_bounds = array<i64: 2, 16>}, {pipeline_mode = #tpu.pipeline_mode<synchronous>, transform_indices = @transform_6, window_bounds = array<i64: 2, 1>}, {transform_indices = @transform_7, window_bounds = array<i64: 2, 512>}]} {
    %c0 = arith.constant 0 : index
    %c0_0 = arith.constant 0 : index
    %0 = vector.load %arg1[%c0, %c0_0] : memref<1x512xf32, #tpu.memory_space<vmem>>, vector<1x512xf32>
    %c0_1 = arith.constant 0 : index
    %c0_2 = arith.constant 0 : index
    %1 = vector.load %arg2[%c0_1, %c0_2] : memref<16x1xf32, #tpu.memory_space<vmem>>, vector<16x1xf32>
    %2 = vector.broadcast %1 : vector<16x1xf32> to vector<16x512xf32>
    %3 = vector.broadcast %0 : vector<1x512xf32> to vector<16x512xf32>
    %4 = arith.mulf %2, %3 : vector<16x512xf32>
    %c0_3 = arith.constant 0 : index
    %c0_4 = arith.constant 0 : index
    %5 = vector.load %arg3[%c0_3, %c0_4] : memref<16x1xf32, #tpu.memory_space<vmem>>, vector<16x1xf32>
    %6 = vector.broadcast %5 : vector<16x1xf32> to vector<16x512xf32>
    %7 = arith.addf %4, %6 : vector<16x512xf32>
    %cst = arith.constant 0.000000e+00 : f32
    %8 = vector.broadcast %cst : f32 to vector<16x512xf32>
    %9 = arith.subf %8, %7 : vector<16x512xf32>
    %10 = math.exp %9 : vector<16x512xf32>
    %cst_5 = arith.constant 1.000000e+00 : f32
    %11 = vector.broadcast %cst_5 : f32 to vector<16x512xf32>
    %12 = arith.addf %11, %10 : vector<16x512xf32>
    %13 = tpu.reciprocal %12 {approx = true} : vector<16x512xf32> -> vector<16x512xf32>
    %14 = arith.mulf %12, %13 : vector<16x512xf32>
    %cst_6 = arith.constant 2.000000e+00 : f32
    %15 = vector.broadcast %cst_6 : f32 to vector<16x512xf32>
    %16 = arith.subf %15, %14 : vector<16x512xf32>
    %17 = arith.mulf %13, %16 : vector<16x512xf32>
    %18 = arith.mulf %7, %17 : vector<16x512xf32>
    %c0_7 = arith.constant 0 : index
    %c0_8 = arith.constant 0 : index
    %c0_9 = arith.constant 0 : index
    %19 = vector.load %arg4[%c0_7, %c0_8, %c0_9] : memref<3x16x16xf32, #tpu.memory_space<vmem>>, vector<1x16x16xf32>
    %20 = vector.shape_cast %19 : vector<1x16x16xf32> to vector<16x16xf32>
    %cst_10 = arith.constant dense<0.000000e+00> : vector<16x512xf32>
    %21 = tpu.matmul %20, %18, %cst_10 {dimension_numbers = #tpu.dot_dimension_numbers<[1], [0], [0], [1], [0, 0, 1, 1], [], []>} : vector<16x16xf32>, vector<16x512xf32>, vector<16x512xf32> -> vector<16x512xf32>
    %c0_11 = arith.constant 0 : index
    %c0_12 = arith.constant 0 : index
    %c0_13 = arith.constant 0 : index
    %22 = vector.load %arg5[%c0_11, %c0_12, %c0_13] : memref<3x16x1xf32, #tpu.memory_space<vmem>>, vector<1x16x1xf32>
    %23 = vector.shape_cast %22 : vector<1x16x1xf32> to vector<16x1xf32>
    %24 = vector.broadcast %23 : vector<16x1xf32> to vector<16x512xf32>
    %25 = arith.addf %21, %24 : vector<16x512xf32>
    %cst_14 = arith.constant 0.000000e+00 : f32
    %26 = vector.broadcast %cst_14 : f32 to vector<16x512xf32>
    %27 = arith.subf %26, %25 : vector<16x512xf32>
    %28 = math.exp %27 : vector<16x512xf32>
    %cst_15 = arith.constant 1.000000e+00 : f32
    %29 = vector.broadcast %cst_15 : f32 to vector<16x512xf32>
    %30 = arith.addf %29, %28 : vector<16x512xf32>
    %31 = tpu.reciprocal %30 {approx = true} : vector<16x512xf32> -> vector<16x512xf32>
    %32 = arith.mulf %30, %31 : vector<16x512xf32>
    %cst_16 = arith.constant 2.000000e+00 : f32
    %33 = vector.broadcast %cst_16 : f32 to vector<16x512xf32>
    %34 = arith.subf %33, %32 : vector<16x512xf32>
    %35 = arith.mulf %31, %34 : vector<16x512xf32>
    %36 = arith.mulf %25, %35 : vector<16x512xf32>
    %c1 = arith.constant 1 : index
    %c0_17 = arith.constant 0 : index
    %c0_18 = arith.constant 0 : index
    %37 = vector.load %arg4[%c1, %c0_17, %c0_18] : memref<3x16x16xf32, #tpu.memory_space<vmem>>, vector<1x16x16xf32>
    %38 = vector.shape_cast %37 : vector<1x16x16xf32> to vector<16x16xf32>
    %cst_19 = arith.constant dense<0.000000e+00> : vector<16x512xf32>
    %39 = tpu.matmul %38, %36, %cst_19 {dimension_numbers = #tpu.dot_dimension_numbers<[1], [0], [0], [1], [0, 0, 1, 1], [], []>} : vector<16x16xf32>, vector<16x512xf32>, vector<16x512xf32> -> vector<16x512xf32>
    %c1_20 = arith.constant 1 : index
    %c0_21 = arith.constant 0 : index
    %c0_22 = arith.constant 0 : index
    %40 = vector.load %arg5[%c1_20, %c0_21, %c0_22] : memref<3x16x1xf32, #tpu.memory_space<vmem>>, vector<1x16x1xf32>
    %41 = vector.shape_cast %40 : vector<1x16x1xf32> to vector<16x1xf32>
    %42 = vector.broadcast %41 : vector<16x1xf32> to vector<16x512xf32>
    %43 = arith.addf %39, %42 : vector<16x512xf32>
    %cst_23 = arith.constant 0.000000e+00 : f32
    %44 = vector.broadcast %cst_23 : f32 to vector<16x512xf32>
    %45 = arith.subf %44, %43 : vector<16x512xf32>
    %46 = math.exp %45 : vector<16x512xf32>
    %cst_24 = arith.constant 1.000000e+00 : f32
    %47 = vector.broadcast %cst_24 : f32 to vector<16x512xf32>
    %48 = arith.addf %47, %46 : vector<16x512xf32>
    %49 = tpu.reciprocal %48 {approx = true} : vector<16x512xf32> -> vector<16x512xf32>
    %50 = arith.mulf %48, %49 : vector<16x512xf32>
    %cst_25 = arith.constant 2.000000e+00 : f32
    %51 = vector.broadcast %cst_25 : f32 to vector<16x512xf32>
    %52 = arith.subf %51, %50 : vector<16x512xf32>
    %53 = arith.mulf %49, %52 : vector<16x512xf32>
    %54 = arith.mulf %43, %53 : vector<16x512xf32>
    %c2 = arith.constant 2 : index
    %c0_26 = arith.constant 0 : index
    %c0_27 = arith.constant 0 : index
    %55 = vector.load %arg4[%c2, %c0_26, %c0_27] : memref<3x16x16xf32, #tpu.memory_space<vmem>>, vector<1x16x16xf32>
    %56 = vector.shape_cast %55 : vector<1x16x16xf32> to vector<16x16xf32>
    %cst_28 = arith.constant dense<0.000000e+00> : vector<16x512xf32>
    %57 = tpu.matmul %56, %54, %cst_28 {dimension_numbers = #tpu.dot_dimension_numbers<[1], [0], [0], [1], [0, 0, 1, 1], [], []>} : vector<16x16xf32>, vector<16x512xf32>, vector<16x512xf32> -> vector<16x512xf32>
    %c2_29 = arith.constant 2 : index
    %c0_30 = arith.constant 0 : index
    %c0_31 = arith.constant 0 : index
    %58 = vector.load %arg5[%c2_29, %c0_30, %c0_31] : memref<3x16x1xf32, #tpu.memory_space<vmem>>, vector<1x16x1xf32>
    %59 = vector.shape_cast %58 : vector<1x16x1xf32> to vector<16x1xf32>
    %60 = vector.broadcast %59 : vector<16x1xf32> to vector<16x512xf32>
    %61 = arith.addf %57, %60 : vector<16x512xf32>
    %cst_32 = arith.constant 0.000000e+00 : f32
    %62 = vector.broadcast %cst_32 : f32 to vector<16x512xf32>
    %63 = arith.subf %62, %61 : vector<16x512xf32>
    %64 = math.exp %63 : vector<16x512xf32>
    %cst_33 = arith.constant 1.000000e+00 : f32
    %65 = vector.broadcast %cst_33 : f32 to vector<16x512xf32>
    %66 = arith.addf %65, %64 : vector<16x512xf32>
    %67 = tpu.reciprocal %66 {approx = true} : vector<16x512xf32> -> vector<16x512xf32>
    %68 = arith.mulf %66, %67 : vector<16x512xf32>
    %cst_34 = arith.constant 2.000000e+00 : f32
    %69 = vector.broadcast %cst_34 : f32 to vector<16x512xf32>
    %70 = arith.subf %69, %68 : vector<16x512xf32>
    %71 = arith.mulf %67, %70 : vector<16x512xf32>
    %72 = arith.mulf %61, %71 : vector<16x512xf32>
    %c0_35 = arith.constant 0 : index
    %c0_36 = arith.constant 0 : index
    %73 = vector.load %arg6[%c0_35, %c0_36] : memref<2x16xf32, #tpu.memory_space<vmem>>, vector<2x16xf32>
    %cst_37 = arith.constant dense<0.000000e+00> : vector<2x512xf32>
    %74 = tpu.matmul %73, %72, %cst_37 {dimension_numbers = #tpu.dot_dimension_numbers<[1], [0], [0], [1], [0, 0, 1, 1], [], []>} : vector<2x16xf32>, vector<16x512xf32>, vector<2x512xf32> -> vector<2x512xf32>
    %c0_38 = arith.constant 0 : index
    %c0_39 = arith.constant 0 : index
    %75 = vector.load %arg7[%c0_38, %c0_39] : memref<2x1xf32, #tpu.memory_space<vmem>>, vector<2x1xf32>
    %76 = vector.broadcast %75 : vector<2x1xf32> to vector<2x512xf32>
    %77 = arith.addf %74, %76 : vector<2x512xf32>
    %c0_40 = arith.constant 0 : index
    %c0_41 = arith.constant 0 : index
    %78 = vector.load %arg8[%c0_40, %c0_41] : memref<2x512xf32, #tpu.memory_space<vmem>>, vector<2x512xf32>
    tpu.vector_store %arg8[%c0_40, %c0_41], %77 {strides = array<i32>} : memref<2x512xf32, #tpu.memory_space<vmem>>, vector<2x512xf32>,
    return
  }
  func.func @transform_0(%arg0: i32) -> (i32, i32) {
    %c0_i32 = arith.constant 0 : i32
    %c0_i32_0 = arith.constant 0 : i32
    return %c0_i32, %arg0 : i32, i32
  }
  func.func @transform_1(%arg0: i32) -> (i32, i32) {
    %c0_i32 = arith.constant 0 : i32
    %c0_i32_0 = arith.constant 0 : i32
    %c0_i32_1 = arith.constant 0 : i32
    return %c0_i32, %c0_i32_0 : i32, i32
  }
  func.func @transform_2(%arg0: i32) -> (i32, i32) {
    %c0_i32 = arith.constant 0 : i32
    %c0_i32_0 = arith.constant 0 : i32
    %c0_i32_1 = arith.constant 0 : i32
    return %c0_i32, %c0_i32_0 : i32, i32
  }
  func.func @transform_3(%arg0: i32) -> (i32, i32, i32) {
    %c0_i32 = arith.constant 0 : i32
    %c0_i32_0 = arith.constant 0 : i32
    %c0_i32_1 = arith.constant 0 : i32
    %c0_i32_2 = arith.constant 0 : i32
    return %c0_i32, %c0_i32_0, %c0_i32_1 : i32, i32, i32
  }
  func.func @transform_4(%arg0: i32) -> (i32, i32, i32) {
    %c0_i32 = arith.constant 0 : i32
    %c0_i32_0 = arith.constant 0 : i32
    %c0_i32_1 = arith.constant 0 : i32
    %c0_i32_2 = arith.constant 0 : i32
    return %c0_i32, %c0_i32_0, %c0_i32_1 : i32, i32, i32
  }
  func.func @transform_5(%arg0: i32) -> (i32, i32) {
    %c0_i32 = arith.constant 0 : i32
    %c0_i32_0 = arith.constant 0 : i32
    %c0_i32_1 = arith.constant 0 : i32
    return %c0_i32, %c0_i32_0 : i32, i32
  }
  func.func @transform_6(%arg0: i32) -> (i32, i32) {
    %c0_i32 = arith.constant 0 : i32
    %c0_i32_0 = arith.constant 0 : i32
    %c0_i32_1 = arith.constant 0 : i32
    return %c0_i32, %c0_i32_0 : i32, i32
  }
  func.func @transform_7(%arg0: i32) -> (i32, i32) {
    %c0_i32 = arith.constant 0 : i32
    %c0_i32_0 = arith.constant 0 : i32
    return %c0_i32, %arg0 : i32, i32
  }
}

</mosaic_0001>

<llo_original>
// kernel: tpu_custom_call.1
$region0: #{tpu_custom_call.1}
  #allocation0 [shape = 'u32[]', space=smem, size = 0x4, offset = 0x4, fixed_abs, tag = 'smem constant byte address 0x4 - core index']
  #allocation1 [shape = 'u32[144,128]{1,0:T(1,128)}', space=vmem, size = 0x12000, scoped, tag = 'internal scratch']
  %s0 = inlined_call_operand.vmem [shape: f32[1,1024], index: 0, kind: input, shape index: {}]
  %s1 = inlined_call_operand.vmem [shape: f32[16,1], index: 1, kind: input, shape index: {}]
  %s2 = inlined_call_operand.vmem [shape: f32[16,1], index: 2, kind: input, shape index: {}]
  %s3 = inlined_call_operand.vmem [shape: f32[3,16,16], index: 3, kind: input, shape index: {}]
  %s4 = inlined_call_operand.vmem [shape: f32[3,16,1], index: 4, kind: input, shape index: {}]
  %s5 = inlined_call_operand.vmem [shape: f32[2,16], index: 5, kind: input, shape index: {}]
  %s6 = inlined_call_operand.vmem [shape: f32[2,1], index: 6, kind: input, shape index: {}]
  %s7 = inlined_call_operand.hbm [shape: f32[2,1024], index: 7, kind: output, shape index: {}]
  %s8 = sld [smem:[#allocation0]]
  $region61: #{tpu_custom_call.1} parent=0
    _
  %s10 = ssub.s32 1, %s8
  %s11 = scalar_select 0, %s10, %s8
  $region1: #{tpu_custom_call.1} parent=0
    #allocation2 [shape = 'u8[8192]{0}', space=vmem, size = 0x2000, scoped, tag = 'output window, operand 0']
    #allocation3 [shape = 's32[2]{0}', space=sflag, size = 0x8, scoped, tag = 'scoped memory for tpu_custom_call.1']
    %12 = vsyncpa [#allocation3], 0
    %s13 = scalar_lea.sflag [#allocation3], 1
    %14 = vsyncpa %s13, 0
    loop: start=0, step=1, limit=4
    $region2: #{tpu_custom_call.1} parent=1 // loop_pre_header
      _
    $region3: #{tpu_custom_call.1} parent=1 // loop_header
      %s16 = sphi 0, %s20
      %p17 = scmp.ge.s32.totalorder %s16, 4
      %s26 = sphi 0, %s28
      %s29 = sphi 0, %s26
      %s30 = sphi 0, %s29
      %s46 = sphi 0, %s30
      %s50 = sphi 0, %s50
      %s52 = sphi 0, %s50
      %s53 = sphi 0, %s52
      %s67 = sphi 0, %s53
      %s71 = sphi 0, %s71
      %s73 = sphi 0, %s71
      %s74 = sphi 0, %s73
      %s88 = sphi 0, %s74
      %s92 = sphi 0, %s92
      %s94 = sphi 0, %s92
      %s95 = sphi 0, %s94
      %s109 = sphi 0, %s95
      %s113 = sphi 0, %s113
      %s115 = sphi 0, %s113
      %s116 = sphi 0, %s115
      %s130 = sphi 0, %s116
      %s134 = sphi 0, %s134
      %s136 = sphi 0, %s134
      %s137 = sphi 0, %s136
      %s151 = sphi 0, %s137
      %s155 = sphi 0, %s155
      %s157 = sphi 0, %s155
      %s158 = sphi 0, %s157
      %s172 = sphi 0, %s158
      %s178 = sphi 0, %s180
      %s181 = sphi 0, %s178
      %s182 = sphi 0, %s181
      %s198 = sphi 0, %s182
    $region4: #{tpu_custom_call.1} parent=1 // loop_header_branch
      %19 = sbr.rel (%p17) target = $region8
    $region5: #{tpu_custom_call.1} parent=1 // loop_body
      %s21 = ssub.s32 %s16, 1
      %s22 = ssub.s32 %s16, 2
      %s23 = sadd.s32 %s16, 1
      %s24 = ssub.s32 %s16, %s23
      %p25 = scmp.eq.s32.totalorder %s24, 0
      %s27 = sadd.s32 %s26, 1
      %s28 = scalar_select %p25, %s26, %s27
      %p31 = pneg %p25
      %p32 = scmp.eq.s32.totalorder %s16, 1
      %p33 = por %p31, %p32
      %p34 = scmp.ne.s32.totalorder %s26, %s29
      %p35 = scmp.eq.s32.totalorder %s16, 0
      %p36 = por %p34, %p35
      %p37 = scmp.ne.s32.totalorder %s26, %s29
      %p38 = scmp.eq.s32.totalorder %s21, 1
      %p39 = por %p37, %p38
      %p40 = scmp.ne.s32.totalorder %s29, %s30
      %p41 = scmp.eq.s32.totalorder %s21, 0
      %p42 = por %p40, %p41
      %p43 = scmp.ne.s32.totalorder %s29, %s30
      %p44 = scmp.eq.s32.totalorder %s22, 1
      %p45 = por %p43, %p44
      %p47 = scmp.ne.s32.totalorder %s30, %s46
      %p48 = scmp.eq.s32.totalorder %s22, 0
      %p49 = por %p47, %p48
      %s51 = sadd.s32 %s50, 1
      %p54 = scmp.eq.s32.totalorder %s16, 1
      %p55 = scmp.ne.s32.totalorder %s50, %s52
      %p56 = scmp.eq.s32.totalorder %s16, 0
      %p57 = por %p55, %p56
      %p58 = scmp.ne.s32.totalorder %s50, %s52
      %p59 = scmp.eq.s32.totalorder %s21, 1
      %p60 = por %p58, %p59
      %p61 = scmp.ne.s32.totalorder %s52, %s53
      %p62 = scmp.eq.s32.totalorder %s21, 0
      %p63 = por %p61, %p62
      %p64 = scmp.ne.s32.totalorder %s52, %s53
      %p65 = scmp.eq.s32.totalorder %s22, 1
      %p66 = por %p64, %p65
      %p68 = scmp.ne.s32.totalorder %s53, %s67
      %p69 = scmp.eq.s32.totalorder %s22, 0
      %p70 = por %p68, %p69
      %s72 = sadd.s32 %s71, 1
      %p75 = scmp.eq.s32.totalorder %s16, 1
      %p76 = scmp.ne.s32.totalorder %s71, %s73
      %p77 = scmp.eq.s32.totalorder %s16, 0
      %p78 = por %p76, %p77
      %p79 = scmp.ne.s32.totalorder %s71, %s73
      %p80 = scmp.eq.s32.totalorder %s21, 1
      %p81 = por %p79, %p80
      %p82 = scmp.ne.s32.totalorder %s73, %s74
      %p83 = scmp.eq.s32.totalorder %s21, 0
      %p84 = por %p82, %p83
      %p85 = scmp.ne.s32.totalorder %s73, %s74
      %p86 = scmp.eq.s32.totalorder %s22, 1
      %p87 = por %p85, %p86
      %p89 = scmp.ne.s32.totalorder %s74, %s88
      %p90 = scmp.eq.s32.totalorder %s22, 0
      %p91 = por %p89, %p90
      %s93 = sadd.s32 %s92, 1
      %p96 = scmp.eq.s32.totalorder %s16, 1
      %p97 = scmp.ne.s32.totalorder %s92, %s94
      %p98 = scmp.eq.s32.totalorder %s16, 0
      %p99 = por %p97, %p98
      %p100 = scmp.ne.s32.totalorder %s92, %s94
      %p101 = scmp.eq.s32.totalorder %s21, 1
      %p102 = por %p100, %p101
      %p103 = scmp.ne.s32.totalorder %s94, %s95
      %p104 = scmp.eq.s32.totalorder %s21, 0
      %p105 = por %p103, %p104
      %p106 = scmp.ne.s32.totalorder %s94, %s95
      %p107 = scmp.eq.s32.totalorder %s22, 1
      %p108 = por %p106, %p107
      %p110 = scmp.ne.s32.totalorder %s95, %s109
      %p111 = scmp.eq.s32.totalorder %s22, 0
      %p112 = por %p110, %p111
      %s114 = sadd.s32 %s113, 1
      %p117 = scmp.eq.s32.totalorder %s16, 1
      %p118 = scmp.ne.s32.totalorder %s113, %s115
      %p119 = scmp.eq.s32.totalorder %s16, 0
      %p120 = por %p118, %p119
      %p121 = scmp.ne.s32.totalorder %s113, %s115
      %p122 = scmp.eq.s32.totalorder %s21, 1
      %p123 = por %p121, %p122
      %p124 = scmp.ne.s32.totalorder %s115, %s116
      %p125 = scmp.eq.s32.totalorder %s21, 0
      %p126 = por %p124, %p125
      %p127 = scmp.ne.s32.totalorder %s115, %s116
      %p128 = scmp.eq.s32.totalorder %s22, 1
      %p129 = por %p127, %p128
      %p131 = scmp.ne.s32.totalorder %s116, %s130
      %p132 = scmp.eq.s32.totalorder %s22, 0
      %p133 = por %p131, %p132
      %s135 = sadd.s32 %s134, 1
      %p138 = scmp.eq.s32.totalorder %s16, 1
      %p139 = scmp.ne.s32.totalorder %s134, %s136
      %p140 = scmp.eq.s32.totalorder %s16, 0
      %p141 = por %p139, %p140
      %p142 = scmp.ne.s32.totalorder %s134, %s136
      %p143 = scmp.eq.s32.totalorder %s21, 1
      %p144 = por %p142, %p143
      %p145 = scmp.ne.s32.totalorder %s136, %s137
      %p146 = scmp.eq.s32.totalorder %s21, 0
      %p147 = por %p145, %p146
      %p148 = scmp.ne.s32.totalorder %s136, %s137
      %p149 = scmp.eq.s32.totalorder %s22, 1
      %p150 = por %p148, %p149
      %p152 = scmp.ne.s32.totalorder %s137, %s151
      %p153 = scmp.eq.s32.totalorder %s22, 0
      %p154 = por %p152, %p153
      %s156 = sadd.s32 %s155, 1
      %p159 = scmp.eq.s32.totalorder %s16, 1
      %p160 = scmp.ne.s32.totalorder %s155, %s157
      %p161 = scmp.eq.s32.totalorder %s16, 0
      %p162 = por %p160, %p161
      %p163 = scmp.ne.s32.totalorder %s155, %s157
      %p164 = scmp.eq.s32.totalorder %s21, 1
      %p165 = por %p163, %p164
      %p166 = scmp.ne.s32.totalorder %s157, %s158
      %p167 = scmp.eq.s32.totalorder %s21, 0
      %p168 = por %p166, %p167
      %p169 = scmp.ne.s32.totalorder %s157, %s158
      %p170 = scmp.eq.s32.totalorder %s22, 1
      %p171 = por %p169, %p170
      %p173 = scmp.ne.s32.totalorder %s158, %s172
      %p174 = scmp.eq.s32.totalorder %s22, 0
      %p175 = por %p173, %p174
      %s176 = ssub.s32 %s16, %s23
      %p177 = scmp.eq.s32.totalorder %s176, 0
      %s179 = sadd.s32 %s178, 1
      %s180 = scalar_select %p177, %s178, %s179
      %p183 = pneg %p177
      %p184 = scmp.eq.s32.totalorder %s16, 1
      %p185 = por %p183, %p184
      %p186 = scmp.ne.s32.totalorder %s178, %s181
      %p187 = scmp.eq.s32.totalorder %s16, 0
      %p188 = por %p186, %p187
      %p189 = scmp.ne.s32.totalorder %s178, %s181
      %p190 = scmp.eq.s32.totalorder %s21, 1
      %p191 = por %p189, %p190
      %p192 = scmp.ne.s32.totalorder %s181, %s182
      %p193 = scmp.eq.s32.totalorder %s21, 0
      %p194 = por %p192, %p193
      %p195 = scmp.ne.s32.totalorder %s181, %s182
      %p196 = scmp.eq.s32.totalorder %s22, 1
      %p197 = por %p195, %p196
      %p199 = scmp.ne.s32.totalorder %s182, %s198
      %p200 = scmp.eq.s32.totalorder %s22, 0
      %p201 = por %p199, %p200
      %p202 = scmp.le.s32.totalorder 1, %s16
      %p203 = scmp.lt.s32.totalorder %s16, 3
      %p204 = pnand %p202, %p203
      %p205 = pneg %p204
      // Predicated region
      $region9: #{tpu_custom_call.1} parent=5 // pred_check
        _
      $region10: #{tpu_custom_call.1} parent=5 // pred_check_branch
        %207 = sbr.rel (%p204) target = $region12
      $region11: #{tpu_custom_call.1} parent=5 // pred_region
        %s208 = ssub.s32 %s16, 1
        // Predicated region
        $region13: #{tpu_custom_call.1} parent=11 // pred_check
          %p209 = pneg %p63
        $region14: #{tpu_custom_call.1} parent=11 // pred_check_branch
          %211 = sbr.rel (%p209) target = $region16
        $region15: #{tpu_custom_call.1} parent=11 // pred_region
          _
        $region16: #{tpu_custom_call.1} parent=11 // pred_fallthru
          _
        // Predicated region
        $region17: #{tpu_custom_call.1} parent=11 // pred_check
          %p212 = pneg %p84
        $region18: #{tpu_custom_call.1} parent=11 // pred_check_branch
          %214 = sbr.rel (%p212) target = $region20
        $region19: #{tpu_custom_call.1} parent=11 // pred_region
          _
        $region20: #{tpu_custom_call.1} parent=11 // pred_fallthru
          _
        // Predicated region
        $region21: #{tpu_custom_call.1} parent=11 // pred_check
          %p215 = pneg %p105
        $region22: #{tpu_custom_call.1} parent=11 // pred_check_branch
          %217 = sbr.rel (%p215) target = $region24
        $region23: #{tpu_custom_call.1} parent=11 // pred_region
          _
        $region24: #{tpu_custom_call.1} parent=11 // pred_fallthru
          _
        // Predicated region
        $region25: #{tpu_custom_call.1} parent=11 // pred_check
          %p218 = pneg %p126
        $region26: #{tpu_custom_call.1} parent=11 // pred_check_branch
          %220 = sbr.rel (%p218) target = $region28
        $region27: #{tpu_custom_call.1} parent=11 // pred_region
          _
        $region28: #{tpu_custom_call.1} parent=11 // pred_fallthru
          _
        // Predicated region
        $region29: #{tpu_custom_call.1} parent=11 // pred_check
          %p221 = pneg %p147
        $region30: #{tpu_custom_call.1} parent=11 // pred_check_branch
          %223 = sbr.rel (%p221) target = $region32
        $region31: #{tpu_custom_call.1} parent=11 // pred_region
          _
        $region32: #{tpu_custom_call.1} parent=11 // pred_fallthru
          _
        // Predicated region
        $region33: #{tpu_custom_call.1} parent=11 // pred_check
          %p224 = pneg %p168
        $region34: #{tpu_custom_call.1} parent=11 // pred_check_branch
          %226 = sbr.rel (%p224) target = $region36
        $region35: #{tpu_custom_call.1} parent=11 // pred_region
          _
        $region36: #{tpu_custom_call.1} parent=11 // pred_fallthru
          _
      $region12: #{tpu_custom_call.1} parent=5 // pred_fallthru
        _
      %p227 = scmp.lt.s32.totalorder %s16, 2
      // Predicated region
      $region37: #{tpu_custom_call.1} parent=5 // pred_check
        %p228 = pneg %p227
      $region38: #{tpu_custom_call.1} parent=5 // pred_check_branch
        %230 = sbr.rel (%p228) target = $region40
      $region39: #{tpu_custom_call.1} parent=5 // pred_region
        // Predicated region
        $region41: #{tpu_custom_call.1} parent=39 // pred_check
          %p231 = pneg %p36
        $region42: #{tpu_custom_call.1} parent=39 // pred_check_branch
          %233 = sbr.rel (%p231) target = $region44
        $region43: #{tpu_custom_call.1} parent=39 // pred_region
          %s234 = smul.u32 4, %s16
          %p235 = scmp.lt.s32.totalorder %s234, 7
          %s236 = scalar_select %p235, %s234, 7
          %s237 = scalar_lea.vmem %s0, %s236
          %s238 = smul.u32 4, %s16
        $region44: #{tpu_custom_call.1} parent=39 // pred_fallthru
          _
      $region40: #{tpu_custom_call.1} parent=5 // pred_fallthru
        _
      %p239 = scmp.le.s32.totalorder 1, %s16
      %p240 = scmp.lt.s32.totalorder %s16, 3
      %p241 = pnand %p239, %p240
      %p242 = pneg %p241
      // Predicated region
      $region45: #{tpu_custom_call.1} parent=5 // pred_check
        _
      $region46: #{tpu_custom_call.1} parent=5 // pred_check_branch
        %244 = sbr.rel (%p241) target = $region48
      $region47: #{tpu_custom_call.1} parent=5 // pred_region
        %s245 = ssub.s32 %s16, 1
        %s246 = smul.u32 4, %s21
        %p247 = scmp.lt.s32.totalorder %s246, 7
        %s248 = scalar_select %p247, %s246, 7
        %s249 = scalar_lea.vmem %s0, %s248
        %p250 = pneg %p42
        %p251 = pneg %p39
        %p252 = pneg %p63
        %p253 = pneg %p60
        %p254 = pneg %p84
        %p255 = pneg %p81
        %p256 = pneg %p105
        %p257 = pneg %p102
        %p258 = pneg %p126
        %p259 = pneg %p123
        %p260 = pneg %p147
        %p261 = pneg %p144
        %p262 = pneg %p168
        %p263 = pneg %p165
        %p264 = pneg %p194
        %p265 = pneg %p191
        %s266 = sand.u32 %s181, 1
        %s267 = scalar_lea.sflag [#allocation3], %s266
        %s268 = sand.u32 %s181, 1
        %s269 = smul.addr %s268, 8
        %s270 = scalar_lea.vmem [#allocation2], %s269
        %s271 = smul.u32 4, %s21
        %p272 = scmp.lt.s32.totalorder %s271, 7
        %s273 = scalar_select %p272, %s271, 7
        %s274 = scalar_lea.vmem %s0, %s273
        %s275 = smul.u32 4, %s21
        %s276 = smul.u32 4, %s21
        %v277 = vld [vmem:[%s274] sm:$0xf]
        %v278 = vld [vmem:[%s1] sm:$0xff]
        %v279 = vld [vmem:[%s1 + $0x8] sm:$0xff]
        %281 = vset.pattern.permute.xlu0 0
        %282 = vperm.xlu0 %281, %v278
        %v283 = vpop.permute.xlu0 %282
        %286 = vset.pattern.permute.xlu0 0
        %287 = vperm.xlu0 %286, %v279
        %v288 = vpop.permute.xlu0 %287
        %v291 = vlaneseq
        %v292 = vshrl.u32 %v291, 7
        %v293 = vsub.s32 0, %v292
        %v294 = vrot.slane %v277, %v293
        %v295 = vlaneseq
        %v296 = vshrl.u32 %v295, 7
        %v297 = vsub.s32 1, %v296
        %v298 = vrot.slane %v277, %v297
        %v299 = vlaneseq
        %v300 = vshrl.u32 %v299, 7
        %v301 = vsub.s32 2, %v300
        %v302 = vrot.slane %v277, %v301
        %v303 = vlaneseq
        %v304 = vshrl.u32 %v303, 7
        %v305 = vsub.s32 3, %v304
        %v306 = vrot.slane %v277, %v305
        %v311 = vmul.f32 %v283, %v294
        %v312 = vmul.f32 %v283, %v298
        %v313 = vmul.f32 %v283, %v302
        %v314 = vmul.f32 %v283, %v306
        %v315 = vmul.f32 %v288, %v294
        %v316 = vmul.f32 %v288, %v298
        %v317 = vmul.f32 %v288, %v302
        %v318 = vmul.f32 %v288, %v306
        %v319 = vld [vmem:[%s2] sm:$0xff]
        %v320 = vld [vmem:[%s2 + $0x8] sm:$0xff]
        %322 = vset.pattern.permute.xlu0 0
        %323 = vperm.xlu0 %322, %v319
        %v324 = vpop.permute.xlu0 %323
        %327 = vset.pattern.permute.xlu0 0
        %328 = vperm.xlu0 %327, %v320
        %v329 = vpop.permute.xlu0 %328
        %v331 = vadd.f32 %v311, %v324
        %v332 = vadd.f32 %v312, %v324
        %v333 = vadd.f32 %v313, %v324
        %v334 = vadd.f32 %v314, %v324
        %v335 = vadd.f32 %v315, %v329
        %v336 = vadd.f32 %v316, %v329
        %v337 = vadd.f32 %v317, %v329
        %v338 = vadd.f32 %v318, %v329
        %v339 = vsub.f32 0.0, %v331
        %v340 = vsub.f32 0.0, %v332
        %v341 = vsub.f32 0.0, %v333
        %v342 = vsub.f32 0.0, %v334
        %v343 = vsub.f32 0.0, %v335
        %v344 = vsub.f32 0.0, %v336
        %v345 = vsub.f32 0.0, %v337
        %v346 = vsub.f32 0.0, %v338
        %v347 = vmul.f32 %v339, 1.442695
        %v348 = vpow.pop %v347
        %v349 = vmul.f32 %v340, 1.442695
        %v350 = vpow.pop %v349
        %v351 = vmul.f32 %v341, 1.442695
        %v352 = vpow.pop %v351
        %v353 = vmul.f32 %v342, 1.442695
        %v354 = vpow.pop %v353
        %v355 = vmul.f32 %v343, 1.442695
        %v356 = vpow.pop %v355
        %v357 = vmul.f32 %v344, 1.442695
        %v358 = vpow.pop %v357
        %v359 = vmul.f32 %v345, 1.442695
        %v360 = vpow.pop %v359
        %v361 = vmul.f32 %v346, 1.442695
        %v362 = vpow.pop %v361
        %v363 = vadd.f32 %v348, 1.0
        %v364 = vadd.f32 %v350, 1.0
        %v365 = vadd.f32 %v352, 1.0
        %v366 = vadd.f32 %v354, 1.0
        %v367 = vadd.f32 %v356, 1.0
        %v368 = vadd.f32 %v358, 1.0
        %v369 = vadd.f32 %v360, 1.0
        %v370 = vadd.f32 %v362, 1.0
        %v371 = vrcp.pop %v363
        %v372 = vrcp.pop %v364
        %v373 = vrcp.pop %v365
        %v374 = vrcp.pop %v366
        %v375 = vrcp.pop %v367
        %v376 = vrcp.pop %v368
        %v377 = vrcp.pop %v369
        %v378 = vrcp.pop %v370
        %v379 = vmul.f32 %v363, %v371
        %v380 = vmul.f32 %v364, %v372
        %v381 = vmul.f32 %v365, %v373
        %v382 = vmul.f32 %v366, %v374
        %v383 = vmul.f32 %v367, %v375
        %v384 = vmul.f32 %v368, %v376
        %v385 = vmul.f32 %v369, %v377
        %v386 = vmul.f32 %v370, %v378
        %v387 = vsub.f32 2.0, %v379
        %v388 = vsub.f32 2.0, %v380
        %v389 = vsub.f32 2.0, %v381
        %v390 = vsub.f32 2.0, %v382
        %v391 = vsub.f32 2.0, %v383
        %v392 = vsub.f32 2.0, %v384
        %v393 = vsub.f32 2.0, %v385
        %v394 = vsub.f32 2.0, %v386
        %v395 = vmul.f32 %v371, %v387
        %v396 = vmul.f32 %v372, %v388
        %v397 = vmul.f32 %v373, %v389
        %v398 = vmul.f32 %v374, %v390
        %v399 = vmul.f32 %v375, %v391
        %v400 = vmul.f32 %v376, %v392
        %v401 = vmul.f32 %v377, %v393
        %v402 = vmul.f32 %v378, %v394
        %v403 = vmul.f32 %v331, %v395
        %v404 = vmul.f32 %v332, %v396
        %v405 = vmul.f32 %v333, %v397
        %v406 = vmul.f32 %v334, %v398
        %v407 = vmul.f32 %v335, %v399
        %v408 = vmul.f32 %v336, %v400
        %v409 = vmul.f32 %v337, %v401
        %v410 = vmul.f32 %v338, %v402
        %v411 = vld [vmem:[%s3] sm:$0xff]
        %v412 = vld [vmem:[%s3 + $0x8] sm:$0xff]
        %v413 = vld [vmem:[%s4] sm:$0xff]
        %v414 = vld [vmem:[%s4 + $0x8] sm:$0xff]
        %416 = vset.pattern.permute.xlu0 0
        %417 = vperm.xlu0 %416, %v413
        %v418 = vpop.permute.xlu0 %417
        %421 = vset.pattern.permute.xlu0 0
        %422 = vperm.xlu0 %421, %v414
        %v423 = vpop.permute.xlu0 %422
        %vm425 = vcmask 130048
        %v427 = vsel %vm425, %v411, 0
        %v430 = vsel %vm425, %v412, 0
        %432 = vmatprep.subr.mxu0 %v404
        %433 = vmatpush1.msra.mxu0 %v403
        %434 = vmatprep.subr.mxu0 %v408
        %435 = vmatpush1.msra.mxu0 %v407
        %436 = vmatprep.subr.mxu0 0.0
        %437 = vmatpush1.msra.mxu0 0.0
        %438 = vmatprep.subr.mxu0 0.0
        %439 = vmatpush1.msra.mxu0 0.0
        %440 = vmatprep.subr.mxu0 0.0
        %441 = vmatpush1.msra.mxu0 0.0
        %442 = vmatprep.subr.mxu0 0.0
        %443 = vmatpush1.msra.mxu0 0.0
        %444 = vmatprep.subr.mxu0 0.0
        %445 = vmatpush1.msra.mxu0 0.0
        %446 = vmatprep.subr.mxu0 0.0
        %447 = vmatpush1.msra.mxu0 0.0
        %448 = vmatprep.subr.mxu0 0.0
        %449 = vmatpush1.msra.mxu0 0.0
        %450 = vmatprep.subr.mxu0 0.0
        %451 = vmatpush1.msra.mxu0 0.0
        %452 = vmatprep.subr.mxu0 0.0
        %453 = vmatpush1.msra.mxu0 0.0
        %454 = vmatprep.subr.mxu0 0.0
        %455 = vmatpush1.msra.mxu0 0.0
        %456 = vmatprep.subr.mxu0 0.0
        %457 = vmatpush1.msra.mxu0 0.0
        %458 = vmatprep.subr.mxu0 0.0
        %459 = vmatpush1.msra.mxu0 0.0
        %460 = vmatprep.subr.mxu0 0.0
        %461 = vmatpush1.msra.mxu0 0.0
        %462 = vmatprep.subr.mxu0 0.0
        %463 = vmatpush1.msra.mxu0 0.0
        %464 = vmatprep.subr.mxu0 0.0
        %465 = vmatpush1.msra.mxu0 0.0
        %466 = vmatprep.subr.mxu0 0.0
        %467 = vmatpush1.msra.mxu0 0.0
        %468 = vmatprep.subr.mxu0 0.0
        %469 = vmatpush1.msra.mxu0 0.0
        %470 = vmatprep.subr.mxu0 0.0
        %471 = vmatpush1.msra.mxu0 0.0
        %472 = vmatprep.subr.mxu0 0.0
        %473 = vmatpush1.msra.mxu0 0.0
        %474 = vmatprep.subr.mxu0 0.0
        %475 = vmatpush1.msra.mxu0 0.0
        %476 = vmatprep.subr.mxu0 0.0
        %477 = vmatpush1.msra.mxu0 0.0
        %478 = vmatprep.subr.mxu0 0.0
        %479 = vmatpush1.msra.mxu0 0.0
        %480 = vmatprep.subr.mxu0 0.0
        %481 = vmatpush1.msra.mxu0 0.0
        %482 = vmatprep.subr.mxu0 0.0
        %483 = vmatpush1.msra.mxu0 0.0
        %484 = vmatprep.subr.mxu0 0.0
        %485 = vmatpush1.msra.mxu0 0.0
        %486 = vmatprep.subr.mxu0 0.0
        %487 = vmatpush1.msra.mxu0 0.0
        %488 = vmatprep.subr.mxu0 0.0
        %489 = vmatpush1.msra.mxu0 0.0
        %490 = vmatprep.subr.mxu0 0.0
        %491 = vmatpush1.msra.mxu0 0.0
        %492 = vmatprep.subr.mxu0 0.0
        %493 = vmatpush1.msra.mxu0 0.0
        %494 = vmatprep.subr.mxu0 0.0
        %495 = vmatpush1.msra.mxu0 0.0
        %496 = vmatprep.mubr.f32.mxu0 0.0
        %497 = vmatmul.mubr.f32.gmra.mrb[0].mxu0 %v427
        %v498 = vpop.f32.mrb[0].mxu0
        %v499 = vadd.f32 %v418, %v498
        %v500 = vpop.f32.mrb[0].mxu0
        %v501 = vadd.f32 %v418, %v500
        %502 = vmatprep.mubr.f32.mxu0 0.0
        %503 = vmatmul.mubr.f32.gmra.mrb[0].mxu0 %v430
        %v504 = vpop.f32.mrb[0].mxu0
        %v505 = vadd.f32 %v423, %v504
        %v506 = vpop.f32.mrb[0].mxu0
        %v507 = vadd.f32 %v423, %v506
        %508 = vdwg.mxu0
        %509 = vmatprep.subr.mxu0 %v406
        %510 = vmatpush1.msra.mxu0 %v405
        %511 = vmatprep.subr.mxu0 %v410
        %512 = vmatpush1.msra.mxu0 %v409
        %513 = vmatprep.subr.mxu0 0.0
        %514 = vmatpush1.msra.mxu0 0.0
        %515 = vmatprep.subr.mxu0 0.0
        %516 = vmatpush1.msra.mxu0 0.0
        %517 = vmatprep.subr.mxu0 0.0
        %518 = vmatpush1.msra.mxu0 0.0
        %519 = vmatprep.subr.mxu0 0.0
        %520 = vmatpush1.msra.mxu0 0.0
        %521 = vmatprep.subr.mxu0 0.0
        %522 = vmatpush1.msra.mxu0 0.0
        %523 = vmatprep.subr.mxu0 0.0
        %524 = vmatpush1.msra.mxu0 0.0
        %525 = vmatprep.subr.mxu0 0.0
        %526 = vmatpush1.msra.mxu0 0.0
        %527 = vmatprep.subr.mxu0 0.0
        %528 = vmatpush1.msra.mxu0 0.0
        %529 = vmatprep.subr.mxu0 0.0
        %530 = vmatpush1.msra.mxu0 0.0
        %531 = vmatprep.subr.mxu0 0.0
        %532 = vmatpush1.msra.mxu0 0.0
        %533 = vmatprep.subr.mxu0 0.0
        %534 = vmatpush1.msra.mxu0 0.0
        %535 = vmatprep.subr.mxu0 0.0
        %536 = vmatpush1.msra.mxu0 0.0
        %537 = vmatprep.subr.mxu0 0.0
        %538 = vmatpush1.msra.mxu0 0.0
        %539 = vmatprep.subr.mxu0 0.0
        %540 = vmatpush1.msra.mxu0 0.0
        %541 = vmatprep.subr.mxu0 0.0
        %542 = vmatpush1.msra.mxu0 0.0
        %543 = vmatprep.subr.mxu0 0.0
        %544 = vmatpush1.msra.mxu0 0.0
        %545 = vmatprep.subr.mxu0 0.0
        %546 = vmatpush1.msra.mxu0 0.0
        %547 = vmatprep.subr.mxu0 0.0
        %548 = vmatpush1.msra.mxu0 0.0
        %549 = vmatprep.subr.mxu0 0.0
        %550 = vmatpush1.msra.mxu0 0.0
        %551 = vmatprep.subr.mxu0 0.0
        %552 = vmatpush1.msra.mxu0 0.0
        %553 = vmatprep.subr.mxu0 0.0
        %554 = vmatpush1.msra.mxu0 0.0
        %555 = vmatprep.subr.mxu0 0.0
        %556 = vmatpush1.msra.mxu0 0.0
        %557 = vmatprep.subr.mxu0 0.0
        %558 = vmatpush1.msra.mxu0 0.0
        %559 = vmatprep.subr.mxu0 0.0
        %560 = vmatpush1.msra.mxu0 0.0
        %561 = vmatprep.subr.mxu0 0.0
        %562 = vmatpush1.msra.mxu0 0.0
        %563 = vmatprep.subr.mxu0 0.0
        %564 = vmatpush1.msra.mxu0 0.0
        %565 = vmatprep.subr.mxu0 0.0
        %566 = vmatpush1.msra.mxu0 0.0
        %567 = vmatprep.subr.mxu0 0.0
        %568 = vmatpush1.msra.mxu0 0.0
        %569 = vmatprep.subr.mxu0 0.0
        %570 = vmatpush1.msra.mxu0 0.0
        %571 = vmatprep.subr.mxu0 0.0
        %572 = vmatpush1.msra.mxu0 0.0
        %573 = vmatprep.mubr.f32.mxu0 0.0
        %574 = vmatmul.mubr.f32.gmra.mrb[0].mxu0 %v427
        %v575 = vpop.f32.mrb[0].mxu0
        %v576 = vadd.f32 %v418, %v575
        %v577 = vpop.f32.mrb[0].mxu0
        %v578 = vadd.f32 %v418, %v577
        %579 = vmatprep.mubr.f32.mxu0 0.0
        %580 = vmatmul.mubr.f32.gmra.mrb[0].mxu0 %v430
        %v581 = vpop.f32.mrb[0].mxu0
        %v582 = vadd.f32 %v423, %v581
        %v583 = vpop.f32.mrb[0].mxu0
        %v584 = vadd.f32 %v423, %v583
        %585 = vdwg.mxu0
        %v586 = vsub.f32 0.0, %v499
        %v587 = vsub.f32 0.0, %v501
        %v588 = vsub.f32 0.0, %v576
        %v589 = vsub.f32 0.0, %v578
        %v590 = vsub.f32 0.0, %v505
        %v591 = vsub.f32 0.0, %v507
        %v592 = vsub.f32 0.0, %v582
        %v593 = vsub.f32 0.0, %v584
        %v594 = vmul.f32 %v586, 1.442695
        %v595 = vpow.pop %v594
        %v596 = vmul.f32 %v587, 1.442695
        %v597 = vpow.pop %v596
        %v598 = vmul.f32 %v588, 1.442695
        %v599 = vpow.pop %v598
        %v600 = vmul.f32 %v589, 1.442695
        %v601 = vpow.pop %v600
        %v602 = vmul.f32 %v590, 1.442695
        %v603 = vpow.pop %v602
        %v604 = vmul.f32 %v591, 1.442695
        %v605 = vpow.pop %v604
        %v606 = vmul.f32 %v592, 1.442695
        %v607 = vpow.pop %v606
        %v608 = vmul.f32 %v593, 1.442695
        %v609 = vpow.pop %v608
        %v610 = vadd.f32 %v595, 1.0
        %v611 = vadd.f32 %v597, 1.0
        %v612 = vadd.f32 %v599, 1.0
        %v613 = vadd.f32 %v601, 1.0
        %v614 = vadd.f32 %v603, 1.0
        %v615 = vadd.f32 %v605, 1.0
        %v616 = vadd.f32 %v607, 1.0
        %v617 = vadd.f32 %v609, 1.0
        %v618 = vrcp.pop %v610
        %v619 = vrcp.pop %v611
        %v620 = vrcp.pop %v612
        %v621 = vrcp.pop %v613
        %v622 = vrcp.pop %v614
        %v623 = vrcp.pop %v615
        %v624 = vrcp.pop %v616
        %v625 = vrcp.pop %v617
        %v626 = vmul.f32 %v610, %v618
        %v627 = vmul.f32 %v611, %v619
        %v628 = vmul.f32 %v612, %v620
        %v629 = vmul.f32 %v613, %v621
        %v630 = vmul.f32 %v614, %v622
        %v631 = vmul.f32 %v615, %v623
        %v632 = vmul.f32 %v616, %v624
        %v633 = vmul.f32 %v617, %v625
        %v634 = vsub.f32 2.0, %v626
        %v635 = vsub.f32 2.0, %v627
        %v636 = vsub.f32 2.0, %v628
        %v637 = vsub.f32 2.0, %v629
        %v638 = vsub.f32 2.0, %v630
        %v639 = vsub.f32 2.0, %v631
        %v640 = vsub.f32 2.0, %v632
        %v641 = vsub.f32 2.0, %v633
        %v642 = vmul.f32 %v618, %v634
        %v643 = vmul.f32 %v619, %v635
        %v644 = vmul.f32 %v620, %v636
        %v645 = vmul.f32 %v621, %v637
        %v646 = vmul.f32 %v622, %v638
        %v647 = vmul.f32 %v623, %v639
        %v648 = vmul.f32 %v624, %v640
        %v649 = vmul.f32 %v625, %v641
        %v650 = vmul.f32 %v499, %v642
        %v651 = vmul.f32 %v501, %v643
        %v652 = vmul.f32 %v576, %v644
        %v653 = vmul.f32 %v578, %v645
        %v654 = vmul.f32 %v505, %v646
        %v655 = vmul.f32 %v507, %v647
        %v656 = vmul.f32 %v582, %v648
        %v657 = vmul.f32 %v584, %v649
        %s658 = scalar_lea.vmem %s3, 16
        %v659 = vld [vmem:[%s658] sm:$0xff]
        %v660 = vld [vmem:[%s658 + $0x8] sm:$0xff]
        %s661 = scalar_lea.vmem %s4, 16
        %v662 = vld [vmem:[%s661] sm:$0xff]
        %v663 = vld [vmem:[%s661 + $0x8] sm:$0xff]
        %665 = vset.pattern.permute.xlu0 0
        %666 = vperm.xlu0 %665, %v662
        %v667 = vpop.permute.xlu0 %666
        %670 = vset.pattern.permute.xlu0 0
        %671 = vperm.xlu0 %670, %v663
        %v672 = vpop.permute.xlu0 %671
        %v675 = vsel %vm425, %v659, 0
        %v678 = vsel %vm425, %v660, 0
        %680 = vmatprep.subr.mxu0 %v651
        %681 = vmatpush1.msra.mxu0 %v650
        %682 = vmatprep.subr.mxu0 %v655
        %683 = vmatpush1.msra.mxu0 %v654
        %684 = vmatprep.subr.mxu0 0.0
        %685 = vmatpush1.msra.mxu0 0.0
        %686 = vmatprep.subr.mxu0 0.0
        %687 = vmatpush1.msra.mxu0 0.0
        %688 = vmatprep.subr.mxu0 0.0
        %689 = vmatpush1.msra.mxu0 0.0
        %690 = vmatprep.subr.mxu0 0.0
        %691 = vmatpush1.msra.mxu0 0.0
        %692 = vmatprep.subr.mxu0 0.0
        %693 = vmatpush1.msra.mxu0 0.0
        %694 = vmatprep.subr.mxu0 0.0
        %695 = vmatpush1.msra.mxu0 0.0
        %696 = vmatprep.subr.mxu0 0.0
        %697 = vmatpush1.msra.mxu0 0.0
        %698 = vmatprep.subr.mxu0 0.0
        %699 = vmatpush1.msra.mxu0 0.0
        %700 = vmatprep.subr.mxu0 0.0
        %701 = vmatpush1.msra.mxu0 0.0
        %702 = vmatprep.subr.mxu0 0.0
        %703 = vmatpush1.msra.mxu0 0.0
        %704 = vmatprep.subr.mxu0 0.0
        %705 = vmatpush1.msra.mxu0 0.0
        %706 = vmatprep.subr.mxu0 0.0
        %707 = vmatpush1.msra.mxu0 0.0
        %708 = vmatprep.subr.mxu0 0.0
        %709 = vmatpush1.msra.mxu0 0.0
        %710 = vmatprep.subr.mxu0 0.0
        %711 = vmatpush1.msra.mxu0 0.0
        %712 = vmatprep.subr.mxu0 0.0
        %713 = vmatpush1.msra.mxu0 0.0
        %714 = vmatprep.subr.mxu0 0.0
        %715 = vmatpush1.msra.mxu0 0.0
        %716 = vmatprep.subr.mxu0 0.0
        %717 = vmatpush1.msra.mxu0 0.0
        %718 = vmatprep.subr.mxu0 0.0
        %719 = vmatpush1.msra.mxu0 0.0
        %720 = vmatprep.subr.mxu0 0.0
        %721 = vmatpush1.msra.mxu0 0.0
        %722 = vmatprep.subr.mxu0 0.0
        %723 = vmatpush1.msra.mxu0 0.0
        %724 = vmatprep.subr.mxu0 0.0
        %725 = vmatpush1.msra.mxu0 0.0
        %726 = vmatprep.subr.mxu0 0.0
        %727 = vmatpush1.msra.mxu0 0.0
        %728 = vmatprep.subr.mxu0 0.0
        %729 = vmatpush1.msra.mxu0 0.0
        %730 = vmatprep.subr.mxu0 0.0
        %731 = vmatpush1.msra.mxu0 0.0
        %732 = vmatprep.subr.mxu0 0.0
        %733 = vmatpush1.msra.mxu0 0.0
        %734 = vmatprep.subr.mxu0 0.0
        %735 = vmatpush1.msra.mxu0 0.0
        %736 = vmatprep.subr.mxu0 0.0
        %737 = vmatpush1.msra.mxu0 0.0
        %738 = vmatprep.subr.mxu0 0.0
        %739 = vmatpush1.msra.mxu0 0.0
        %740 = vmatprep.subr.mxu0 0.0
        %741 = vmatpush1.msra.mxu0 0.0
        %742 = vmatprep.subr.mxu0 0.0
        %743 = vmatpush1.msra.mxu0 0.0
        %744 = vmatprep.mubr.f32.mxu0 0.0
        %745 = vmatmul.mubr.f32.gmra.mrb[0].mxu0 %v675
        %v746 = vpop.f32.mrb[0].mxu0
        %v747 = vadd.f32 %v667, %v746
        %v748 = vpop.f32.mrb[0].mxu0
        %v749 = vadd.f32 %v667, %v748
        %750 = vmatprep.mubr.f32.mxu0 0.0
        %751 = vmatmul.mubr.f32.gmra.mrb[0].mxu0 %v678
        %v752 = vpop.f32.mrb[0].mxu0
        %v753 = vadd.f32 %v672, %v752
        %v754 = vpop.f32.mrb[0].mxu0
        %v755 = vadd.f32 %v672, %v754
        %756 = vdwg.mxu0
        %757 = vmatprep.subr.mxu0 %v653
        %758 = vmatpush1.msra.mxu0 %v652
        %759 = vmatprep.subr.mxu0 %v657
        %760 = vmatpush1.msra.mxu0 %v656
        %761 = vmatprep.subr.mxu0 0.0
        %762 = vmatpush1.msra.mxu0 0.0
        %763 = vmatprep.subr.mxu0 0.0
        %764 = vmatpush1.msra.mxu0 0.0
        %765 = vmatprep.subr.mxu0 0.0
        %766 = vmatpush1.msra.mxu0 0.0
        %767 = vmatprep.subr.mxu0 0.0
        %768 = vmatpush1.msra.mxu0 0.0
        %769 = vmatprep.subr.mxu0 0.0
        %770 = vmatpush1.msra.mxu0 0.0
        %771 = vmatprep.subr.mxu0 0.0
        %772 = vmatpush1.msra.mxu0 0.0
        %773 = vmatprep.subr.mxu0 0.0
        %774 = vmatpush1.msra.mxu0 0.0
        %775 = vmatprep.subr.mxu0 0.0
        %776 = vmatpush1.msra.mxu0 0.0
        %777 = vmatprep.subr.mxu0 0.0
        %778 = vmatpush1.msra.mxu0 0.0
        %779 = vmatprep.subr.mxu0 0.0
        %780 = vmatpush1.msra.mxu0 0.0
        %781 = vmatprep.subr.mxu0 0.0
        %782 = vmatpush1.msra.mxu0 0.0
        %783 = vmatprep.subr.mxu0 0.0
        %784 = vmatpush1.msra.mxu0 0.0
        %785 = vmatprep.subr.mxu0 0.0
        %786 = vmatpush1.msra.mxu0 0.0
        %787 = vmatprep.subr.mxu0 0.0
        %788 = vmatpush1.msra.mxu0 0.0
        %789 = vmatprep.subr.mxu0 0.0
        %790 = vmatpush1.msra.mxu0 0.0
        %791 = vmatprep.subr.mxu0 0.0
        %792 = vmatpush1.msra.mxu0 0.0
        %793 = vmatprep.subr.mxu0 0.0
        %794 = vmatpush1.msra.mxu0 0.0
        %795 = vmatprep.subr.mxu0 0.0
        %796 = vmatpush1.msra.mxu0 0.0
        %797 = vmatprep.subr.mxu0 0.0
        %798 = vmatpush1.msra.mxu0 0.0
        %799 = vmatprep.subr.mxu0 0.0
        %800 = vmatpush1.msra.mxu0 0.0
        %801 = vmatprep.subr.mxu0 0.0
        %802 = vmatpush1.msra.mxu0 0.0
        %803 = vmatprep.subr.mxu0 0.0
        %804 = vmatpush1.msra.mxu0 0.0
        %805 = vmatprep.subr.mxu0 0.0
        %806 = vmatpush1.msra.mxu0 0.0
        %807 = vmatprep.subr.mxu0 0.0
        %808 = vmatpush1.msra.mxu0 0.0
        %809 = vmatprep.subr.mxu0 0.0
        %810 = vmatpush1.msra.mxu0 0.0
        %811 = vmatprep.subr.mxu0 0.0
        %812 = vmatpush1.msra.mxu0 0.0
        %813 = vmatprep.subr.mxu0 0.0
        %814 = vmatpush1.msra.mxu0 0.0
        %815 = vmatprep.subr.mxu0 0.0
        %816 = vmatpush1.msra.mxu0 0.0
        %817 = vmatprep.subr.mxu0 0.0
        %818 = vmatpush1.msra.mxu0 0.0
        %819 = vmatprep.subr.mxu0 0.0
        %820 = vmatpush1.msra.mxu0 0.0
        %821 = vmatprep.mubr.f32.mxu0 0.0
        %822 = vmatmul.mubr.f32.gmra.mrb[0].mxu0 %v675
        %v823 = vpop.f32.mrb[0].mxu0
        %v824 = vadd.f32 %v667, %v823
        %v825 = vpop.f32.mrb[0].mxu0
        %v826 = vadd.f32 %v667, %v825
        %827 = vmatprep.mubr.f32.mxu0 0.0
        %828 = vmatmul.mubr.f32.gmra.mrb[0].mxu0 %v678
        %v829 = vpop.f32.mrb[0].mxu0
        %v830 = vadd.f32 %v672, %v829
        %v831 = vpop.f32.mrb[0].mxu0
        %v832 = vadd.f32 %v672, %v831
        %833 = vdwg.mxu0
        %v834 = vsub.f32 0.0, %v747
        %v835 = vsub.f32 0.0, %v749
        %v836 = vsub.f32 0.0, %v824
        %v837 = vsub.f32 0.0, %v826
        %v838 = vsub.f32 0.0, %v753
        %v839 = vsub.f32 0.0, %v755
        %v840 = vsub.f32 0.0, %v830
        %v841 = vsub.f32 0.0, %v832
        %v842 = vmul.f32 %v834, 1.442695
        %v843 = vpow.pop %v842
        %v844 = vmul.f32 %v835, 1.442695
        %v845 = vpow.pop %v844
        %v846 = vmul.f32 %v836, 1.442695
        %v847 = vpow.pop %v846
        %v848 = vmul.f32 %v837, 1.442695
        %v849 = vpow.pop %v848
        %v850 = vmul.f32 %v838, 1.442695
        %v851 = vpow.pop %v850
        %v852 = vmul.f32 %v839, 1.442695
        %v853 = vpow.pop %v852
        %v854 = vmul.f32 %v840, 1.442695
        %v855 = vpow.pop %v854
        %v856 = vmul.f32 %v841, 1.442695
        %v857 = vpow.pop %v856
        %v858 = vadd.f32 %v843, 1.0
        %v859 = vadd.f32 %v845, 1.0
        %v860 = vadd.f32 %v847, 1.0
        %v861 = vadd.f32 %v849, 1.0
        %v862 = vadd.f32 %v851, 1.0
        %v863 = vadd.f32 %v853, 1.0
        %v864 = vadd.f32 %v855, 1.0
        %v865 = vadd.f32 %v857, 1.0
        %v866 = vrcp.pop %v858
        %v867 = vrcp.pop %v859
        %v868 = vrcp.pop %v860
        %v869 = vrcp.pop %v861
        %v870 = vrcp.pop %v862
        %v871 = vrcp.pop %v863
        %v872 = vrcp.pop %v864
        %v873 = vrcp.pop %v865
        %v874 = vmul.f32 %v858, %v866
        %v875 = vmul.f32 %v859, %v867
        %v876 = vmul.f32 %v860, %v868
        %v877 = vmul.f32 %v861, %v869
        %v878 = vmul.f32 %v862, %v870
        %v879 = vmul.f32 %v863, %v871
        %v880 = vmul.f32 %v864, %v872
        %v881 = vmul.f32 %v865, %v873
        %v882 = vsub.f32 2.0, %v874
        %v883 = vsub.f32 2.0, %v875
        %v884 = vsub.f32 2.0, %v876
        %v885 = vsub.f32 2.0, %v877
        %v886 = vsub.f32 2.0, %v878
        %v887 = vsub.f32 2.0, %v879
        %v888 = vsub.f32 2.0, %v880
        %v889 = vsub.f32 2.0, %v881
        %v890 = vmul.f32 %v866, %v882
        %v891 = vmul.f32 %v867, %v883
        %v892 = vmul.f32 %v868, %v884
        %v893 = vmul.f32 %v869, %v885
        %v894 = vmul.f32 %v870, %v886
        %v895 = vmul.f32 %v871, %v887
        %v896 = vmul.f32 %v872, %v888
        %v897 = vmul.f32 %v873, %v889
        %v898 = vmul.f32 %v747, %v890
        %v899 = vmul.f32 %v749, %v891
        %v900 = vmul.f32 %v824, %v892
        %v901 = vmul.f32 %v826, %v893
        %v902 = vmul.f32 %v753, %v894
        %v903 = vmul.f32 %v755, %v895
        %v904 = vmul.f32 %v830, %v896
        %v905 = vmul.f32 %v832, %v897
        %s906 = scalar_lea.vmem %s3, 32
        %v907 = vld [vmem:[%s906] sm:$0xff]
        %v908 = vld [vmem:[%s906 + $0x8] sm:$0xff]
        %s909 = scalar_lea.vmem %s4, 32
        %v910 = vld [vmem:[%s909] sm:$0xff]
        %v911 = vld [vmem:[%s909 + $0x8] sm:$0xff]
        %913 = vset.pattern.permute.xlu0 0
        %914 = vperm.xlu0 %913, %v910
        %v915 = vpop.permute.xlu0 %914
        %918 = vset.pattern.permute.xlu0 0
        %919 = vperm.xlu0 %918, %v911
        %v920 = vpop.permute.xlu0 %919
        %v923 = vsel %vm425, %v907, 0
        %v926 = vsel %vm425, %v908, 0
        %928 = vmatprep.subr.mxu0 %v899
        %929 = vmatpush1.msra.mxu0 %v898
        %930 = vmatprep.subr.mxu0 %v903
        %931 = vmatpush1.msra.mxu0 %v902
        %932 = vmatprep.subr.mxu0 0.0
        %933 = vmatpush1.msra.mxu0 0.0
        %934 = vmatprep.subr.mxu0 0.0
        %935 = vmatpush1.msra.mxu0 0.0
        %936 = vmatprep.subr.mxu0 0.0
        %937 = vmatpush1.msra.mxu0 0.0
        %938 = vmatprep.subr.mxu0 0.0
        %939 = vmatpush1.msra.mxu0 0.0
        %940 = vmatprep.subr.mxu0 0.0
        %941 = vmatpush1.msra.mxu0 0.0
        %942 = vmatprep.subr.mxu0 0.0
        %943 = vmatpush1.msra.mxu0 0.0
        %944 = vmatprep.subr.mxu0 0.0
        %945 = vmatpush1.msra.mxu0 0.0
        %946 = vmatprep.subr.mxu0 0.0
        %947 = vmatpush1.msra.mxu0 0.0
        %948 = vmatprep.subr.mxu0 0.0
        %949 = vmatpush1.msra.mxu0 0.0
        %950 = vmatprep.subr.mxu0 0.0
        %951 = vmatpush1.msra.mxu0 0.0
        %952 = vmatprep.subr.mxu0 0.0
        %953 = vmatpush1.msra.mxu0 0.0
        %954 = vmatprep.subr.mxu0 0.0
        %955 = vmatpush1.msra.mxu0 0.0
        %956 = vmatprep.subr.mxu0 0.0
        %957 = vmatpush1.msra.mxu0 0.0
        %958 = vmatprep.subr.mxu0 0.0
        %959 = vmatpush1.msra.mxu0 0.0
        %960 = vmatprep.subr.mxu0 0.0
        %961 = vmatpush1.msra.mxu0 0.0
        %962 = vmatprep.subr.mxu0 0.0
        %963 = vmatpush1.msra.mxu0 0.0
        %964 = vmatprep.subr.mxu0 0.0
        %965 = vmatpush1.msra.mxu0 0.0
        %966 = vmatprep.subr.mxu0 0.0
        %967 = vmatpush1.msra.mxu0 0.0
        %968 = vmatprep.subr.mxu0 0.0
        %969 = vmatpush1.msra.mxu0 0.0
        %970 = vmatprep.subr.mxu0 0.0
        %971 = vmatpush1.msra.mxu0 0.0
        %972 = vmatprep.subr.mxu0 0.0
        %973 = vmatpush1.msra.mxu0 0.0
        %974 = vmatprep.subr.mxu0 0.0
        %975 = vmatpush1.msra.mxu0 0.0
        %976 = vmatprep.subr.mxu0 0.0
        %977 = vmatpush1.msra.mxu0 0.0
        %978 = vmatprep.subr.mxu0 0.0
        %979 = vmatpush1.msra.mxu0 0.0
        %980 = vmatprep.subr.mxu0 0.0
        %981 = vmatpush1.msra.mxu0 0.0
        %982 = vmatprep.subr.mxu0 0.0
        %983 = vmatpush1.msra.mxu0 0.0
        %984 = vmatprep.subr.mxu0 0.0
        %985 = vmatpush1.msra.mxu0 0.0
        %986 = vmatprep.subr.mxu0 0.0
        %987 = vmatpush1.msra.mxu0 0.0
        %988 = vmatprep.subr.mxu0 0.0
        %989 = vmatpush1.msra.mxu0 0.0
        %990 = vmatprep.subr.mxu0 0.0
        %991 = vmatpush1.msra.mxu0 0.0
        %992 = vmatprep.mubr.f32.mxu0 0.0
        %993 = vmatmul.mubr.f32.gmra.mrb[0].mxu0 %v923
        %v994 = vpop.f32.mrb[0].mxu0
        %v995 = vadd.f32 %v915, %v994
        %v996 = vpop.f32.mrb[0].mxu0
        %v997 = vadd.f32 %v915, %v996
        %998 = vmatprep.mubr.f32.mxu0 0.0
        %999 = vmatmul.mubr.f32.gmra.mrb[0].mxu0 %v926
        %v1000 = vpop.f32.mrb[0].mxu0
        %v1001 = vadd.f32 %v920, %v1000
        %v1002 = vpop.f32.mrb[0].mxu0
        %v1003 = vadd.f32 %v920, %v1002
        %1004 = vdwg.mxu0
        %1005 = vmatprep.subr.mxu0 %v901
        %1006 = vmatpush1.msra.mxu0 %v900
        %1007 = vmatprep.subr.mxu0 %v905
        %1008 = vmatpush1.msra.mxu0 %v904
        %1009 = vmatprep.subr.mxu0 0.0
        %1010 = vmatpush1.msra.mxu0 0.0
        %1011 = vmatprep.subr.mxu0 0.0
        %1012 = vmatpush1.msra.mxu0 0.0
        %1013 = vmatprep.subr.mxu0 0.0
        %1014 = vmatpush1.msra.mxu0 0.0
        %1015 = vmatprep.subr.mxu0 0.0
        %1016 = vmatpush1.msra.mxu0 0.0
        %1017 = vmatprep.subr.mxu0 0.0
        %1018 = vmatpush1.msra.mxu0 0.0
        %1019 = vmatprep.subr.mxu0 0.0
        %1020 = vmatpush1.msra.mxu0 0.0
        %1021 = vmatprep.subr.mxu0 0.0
        %1022 = vmatpush1.msra.mxu0 0.0
        %1023 = vmatprep.subr.mxu0 0.0
        %1024 = vmatpush1.msra.mxu0 0.0
        %1025 = vmatprep.subr.mxu0 0.0
        %1026 = vmatpush1.msra.mxu0 0.0
        %1027 = vmatprep.subr.mxu0 0.0
        %1028 = vmatpush1.msra.mxu0 0.0
        %1029 = vmatprep.subr.mxu0 0.0
        %1030 = vmatpush1.msra.mxu0 0.0
        %1031 = vmatprep.subr.mxu0 0.0
        %1032 = vmatpush1.msra.mxu0 0.0
        %1033 = vmatprep.subr.mxu0 0.0
        %1034 = vmatpush1.msra.mxu0 0.0
        %1035 = vmatprep.subr.mxu0 0.0
        %1036 = vmatpush1.msra.mxu0 0.0
        %1037 = vmatprep.subr.mxu0 0.0
        %1038 = vmatpush1.msra.mxu0 0.0
        %1039 = vmatprep.subr.mxu0 0.0
        %1040 = vmatpush1.msra.mxu0 0.0
        %1041 = vmatprep.subr.mxu0 0.0
        %1042 = vmatpush1.msra.mxu0 0.0
        %1043 = vmatprep.subr.mxu0 0.0
        %1044 = vmatpush1.msra.mxu0 0.0
        %1045 = vmatprep.subr.mxu0 0.0
        %1046 = vmatpush1.msra.mxu0 0.0
        %1047 = vmatprep.subr.mxu0 0.0
        %1048 = vmatpush1.msra.mxu0 0.0
        %1049 = vmatprep.subr.mxu0 0.0
        %1050 = vmatpush1.msra.mxu0 0.0
        %1051 = vmatprep.subr.mxu0 0.0
        %1052 = vmatpush1.msra.mxu0 0.0
        %1053 = vmatprep.subr.mxu0 0.0
        %1054 = vmatpush1.msra.mxu0 0.0
        %1055 = vmatprep.subr.mxu0 0.0
        %1056 = vmatpush1.msra.mxu0 0.0
        %1057 = vmatprep.subr.mxu0 0.0
        %1058 = vmatpush1.msra.mxu0 0.0
        %1059 = vmatprep.subr.mxu0 0.0
        %1060 = vmatpush1.msra.mxu0 0.0
        %1061 = vmatprep.subr.mxu0 0.0
        %1062 = vmatpush1.msra.mxu0 0.0
        %1063 = vmatprep.subr.mxu0 0.0
        %1064 = vmatpush1.msra.mxu0 0.0
        %1065 = vmatprep.subr.mxu0 0.0
        %1066 = vmatpush1.msra.mxu0 0.0
        %1067 = vmatprep.subr.mxu0 0.0
        %1068 = vmatpush1.msra.mxu0 0.0
        %1069 = vmatprep.mubr.f32.mxu0 0.0
        %1070 = vmatmul.mubr.f32.gmra.mrb[0].mxu0 %v923
        %v1071 = vpop.f32.mrb[0].mxu0
        %v1072 = vadd.f32 %v915, %v1071
        %v1073 = vpop.f32.mrb[0].mxu0
        %v1074 = vadd.f32 %v915, %v1073
        %1075 = vmatprep.mubr.f32.mxu0 0.0
        %1076 = vmatmul.mubr.f32.gmra.mrb[0].mxu0 %v926
        %v1077 = vpop.f32.mrb[0].mxu0
        %v1078 = vadd.f32 %v920, %v1077
        %v1079 = vpop.f32.mrb[0].mxu0
        %v1080 = vadd.f32 %v920, %v1079
        %1081 = vdwg.mxu0
        %v1082 = vsub.f32 0.0, %v995
        %v1083 = vsub.f32 0.0, %v997
        %v1084 = vsub.f32 0.0, %v1072
        %v1085 = vsub.f32 0.0, %v1074
        %v1086 = vsub.f32 0.0, %v1001
        %v1087 = vsub.f32 0.0, %v1003
        %v1088 = vsub.f32 0.0, %v1078
        %v1089 = vsub.f32 0.0, %v1080
        %v1090 = vmul.f32 %v1082, 1.442695
        %v1091 = vpow.pop %v1090
        %v1092 = vmul.f32 %v1083, 1.442695
        %v1093 = vpow.pop %v1092
        %v1094 = vmul.f32 %v1084, 1.442695
        %v1095 = vpow.pop %v1094
        %v1096 = vmul.f32 %v1085, 1.442695
        %v1097 = vpow.pop %v1096
        %v1098 = vmul.f32 %v1086, 1.442695
        %v1099 = vpow.pop %v1098
        %v1100 = vmul.f32 %v1087, 1.442695
        %v1101 = vpow.pop %v1100
        %v1102 = vmul.f32 %v1088, 1.442695
        %v1103 = vpow.pop %v1102
        %v1104 = vmul.f32 %v1089, 1.442695
        %v1105 = vpow.pop %v1104
        %v1106 = vadd.f32 %v1091, 1.0
        %v1107 = vadd.f32 %v1093, 1.0
        %v1108 = vadd.f32 %v1095, 1.0
        %v1109 = vadd.f32 %v1097, 1.0
        %v1110 = vadd.f32 %v1099, 1.0
        %v1111 = vadd.f32 %v1101, 1.0
        %v1112 = vadd.f32 %v1103, 1.0
        %v1113 = vadd.f32 %v1105, 1.0
        %v1114 = vrcp.pop %v1106
        %v1115 = vrcp.pop %v1107
        %v1116 = vrcp.pop %v1108
        %v1117 = vrcp.pop %v1109
        %v1118 = vrcp.pop %v1110
        %v1119 = vrcp.pop %v1111
        %v1120 = vrcp.pop %v1112
        %v1121 = vrcp.pop %v1113
        %v1122 = vmul.f32 %v1106, %v1114
        %v1123 = vmul.f32 %v1107, %v1115
        %v1124 = vmul.f32 %v1108, %v1116
        %v1125 = vmul.f32 %v1109, %v1117
        %v1126 = vmul.f32 %v1110, %v1118
        %v1127 = vmul.f32 %v1111, %v1119
        %v1128 = vmul.f32 %v1112, %v1120
        %v1129 = vmul.f32 %v1113, %v1121
        %v1130 = vsub.f32 2.0, %v1122
        %v1131 = vsub.f32 2.0, %v1123
        %v1132 = vsub.f32 2.0, %v1124
        %v1133 = vsub.f32 2.0, %v1125
        %v1134 = vsub.f32 2.0, %v1126
        %v1135 = vsub.f32 2.0, %v1127
        %v1136 = vsub.f32 2.0, %v1128
        %v1137 = vsub.f32 2.0, %v1129
        %v1138 = vmul.f32 %v1114, %v1130
        %v1139 = vmul.f32 %v1115, %v1131
        %v1140 = vmul.f32 %v1116, %v1132
        %v1141 = vmul.f32 %v1117, %v1133
        %v1142 = vmul.f32 %v1118, %v1134
        %v1143 = vmul.f32 %v1119, %v1135
        %v1144 = vmul.f32 %v1120, %v1136
        %v1145 = vmul.f32 %v1121, %v1137
        %v1146 = vmul.f32 %v995, %v1138
        %v1147 = vmul.f32 %v997, %v1139
        %v1148 = vmul.f32 %v1072, %v1140
        %v1149 = vmul.f32 %v1074, %v1141
        %v1150 = vmul.f32 %v1001, %v1142
        %v1151 = vmul.f32 %v1003, %v1143
        %v1152 = vmul.f32 %v1078, %v1144
        %v1153 = vmul.f32 %v1080, %v1145
        %v1154 = vld [vmem:[%s5] sm:$0x3]
        %v1155 = vld [vmem:[%s6] sm:$0x3]
        %1157 = vset.pattern.permute.xlu0 0
        %1158 = vperm.xlu0 %1157, %v1155
        %v1159 = vpop.permute.xlu0 %1158
        %v1162 = vsel %vm425, %v1154, 0
        %1164 = vmatprep.subr.mxu0 %v1147
        %1165 = vmatpush1.msra.mxu0 %v1146
        %1166 = vmatprep.subr.mxu0 %v1151
        %1167 = vmatpush1.msra.mxu0 %v1150
        %1168 = vmatprep.subr.mxu0 0.0
        %1169 = vmatpush1.msra.mxu0 0.0
        %1170 = vmatprep.subr.mxu0 0.0
        %1171 = vmatpush1.msra.mxu0 0.0
        %1172 = vmatprep.subr.mxu0 0.0
        %1173 = vmatpush1.msra.mxu0 0.0
        %1174 = vmatprep.subr.mxu0 0.0
        %1175 = vmatpush1.msra.mxu0 0.0
        %1176 = vmatprep.subr.mxu0 0.0
        %1177 = vmatpush1.msra.mxu0 0.0
        %1178 = vmatprep.subr.mxu0 0.0
        %1179 = vmatpush1.msra.mxu0 0.0
        %1180 = vmatprep.subr.mxu0 0.0
        %1181 = vmatpush1.msra.mxu0 0.0
        %1182 = vmatprep.subr.mxu0 0.0
        %1183 = vmatpush1.msra.mxu0 0.0
        %1184 = vmatprep.subr.mxu0 0.0
        %1185 = vmatpush1.msra.mxu0 0.0
        %1186 = vmatprep.subr.mxu0 0.0
        %1187 = vmatpush1.msra.mxu0 0.0
        %1188 = vmatprep.subr.mxu0 0.0
        %1189 = vmatpush1.msra.mxu0 0.0
        %1190 = vmatprep.subr.mxu0 0.0
        %1191 = vmatpush1.msra.mxu0 0.0
        %1192 = vmatprep.subr.mxu0 0.0
        %1193 = vmatpush1.msra.mxu0 0.0
        %1194 = vmatprep.subr.mxu0 0.0
        %1195 = vmatpush1.msra.mxu0 0.0
        %1196 = vmatprep.subr.mxu0 0.0
        %1197 = vmatpush1.msra.mxu0 0.0
        %1198 = vmatprep.subr.mxu0 0.0
        %1199 = vmatpush1.msra.mxu0 0.0
        %1200 = vmatprep.subr.mxu0 0.0
        %1201 = vmatpush1.msra.mxu0 0.0
        %1202 = vmatprep.subr.mxu0 0.0
        %1203 = vmatpush1.msra.mxu0 0.0
        %1204 = vmatprep.subr.mxu0 0.0
        %1205 = vmatpush1.msra.mxu0 0.0
        %1206 = vmatprep.subr.mxu0 0.0
        %1207 = vmatpush1.msra.mxu0 0.0
        %1208 = vmatprep.subr.mxu0 0.0
        %1209 = vmatpush1.msra.mxu0 0.0
        %1210 = vmatprep.subr.mxu0 0.0
        %1211 = vmatpush1.msra.mxu0 0.0
        %1212 = vmatprep.subr.mxu0 0.0
        %1213 = vmatpush1.msra.mxu0 0.0
        %1214 = vmatprep.subr.mxu0 0.0
        %1215 = vmatpush1.msra.mxu0 0.0
        %1216 = vmatprep.subr.mxu0 0.0
        %1217 = vmatpush1.msra.mxu0 0.0
        %1218 = vmatprep.subr.mxu0 0.0
        %1219 = vmatpush1.msra.mxu0 0.0
        %1220 = vmatprep.subr.mxu0 0.0
        %1221 = vmatpush1.msra.mxu0 0.0
        %1222 = vmatprep.subr.mxu0 0.0
        %1223 = vmatpush1.msra.mxu0 0.0
        %1224 = vmatprep.subr.mxu0 0.0
        %1225 = vmatpush1.msra.mxu0 0.0
        %1226 = vmatprep.subr.mxu0 0.0
        %1227 = vmatpush1.msra.mxu0 0.0
        %1228 = vmatprep.mubr.f32.mxu0 0.0
        %1229 = vmatmul.mubr.f32.gmra.mrb[0].mxu0 %v1162
        %v1230 = vpop.f32.mrb[0].mxu0
        %v1231 = vadd.f32 %v1159, %v1230
        %v1232 = vpop.f32.mrb[0].mxu0
        %v1233 = vadd.f32 %v1159, %v1232
        %1234 = vdwg.mxu0
        %1235 = vmatprep.subr.mxu0 %v1149
        %1236 = vmatpush1.msra.mxu0 %v1148
        %1237 = vmatprep.subr.mxu0 %v1153
        %1238 = vmatpush1.msra.mxu0 %v1152
        %1239 = vmatprep.subr.mxu0 0.0
        %1240 = vmatpush1.msra.mxu0 0.0
        %1241 = vmatprep.subr.mxu0 0.0
        %1242 = vmatpush1.msra.mxu0 0.0
        %1243 = vmatprep.subr.mxu0 0.0
        %1244 = vmatpush1.msra.mxu0 0.0
        %1245 = vmatprep.subr.mxu0 0.0
        %1246 = vmatpush1.msra.mxu0 0.0
        %1247 = vmatprep.subr.mxu0 0.0
        %1248 = vmatpush1.msra.mxu0 0.0
        %1249 = vmatprep.subr.mxu0 0.0
        %1250 = vmatpush1.msra.mxu0 0.0
        %1251 = vmatprep.subr.mxu0 0.0
        %1252 = vmatpush1.msra.mxu0 0.0
        %1253 = vmatprep.subr.mxu0 0.0
        %1254 = vmatpush1.msra.mxu0 0.0
        %1255 = vmatprep.subr.mxu0 0.0
        %1256 = vmatpush1.msra.mxu0 0.0
        %1257 = vmatprep.subr.mxu0 0.0
        %1258 = vmatpush1.msra.mxu0 0.0
        %1259 = vmatprep.subr.mxu0 0.0
        %1260 = vmatpush1.msra.mxu0 0.0
        %1261 = vmatprep.subr.mxu0 0.0
        %1262 = vmatpush1.msra.mxu0 0.0
        %1263 = vmatprep.subr.mxu0 0.0
        %1264 = vmatpush1.msra.mxu0 0.0
        %1265 = vmatprep.subr.mxu0 0.0
        %1266 = vmatpush1.msra.mxu0 0.0
        %1267 = vmatprep.subr.mxu0 0.0
        %1268 = vmatpush1.msra.mxu0 0.0
        %1269 = vmatprep.subr.mxu0 0.0
        %1270 = vmatpush1.msra.mxu0 0.0
        %1271 = vmatprep.subr.mxu0 0.0
        %1272 = vmatpush1.msra.mxu0 0.0
        %1273 = vmatprep.subr.mxu0 0.0
        %1274 = vmatpush1.msra.mxu0 0.0
        %1275 = vmatprep.subr.mxu0 0.0
        %1276 = vmatpush1.msra.mxu0 0.0
        %1277 = vmatprep.subr.mxu0 0.0
        %1278 = vmatpush1.msra.mxu0 0.0
        %1279 = vmatprep.subr.mxu0 0.0
        %1280 = vmatpush1.msra.mxu0 0.0
        %1281 = vmatprep.subr.mxu0 0.0
        %1282 = vmatpush1.msra.mxu0 0.0
        %1283 = vmatprep.subr.mxu0 0.0
        %1284 = vmatpush1.msra.mxu0 0.0
        %1285 = vmatprep.subr.mxu0 0.0
        %1286 = vmatpush1.msra.mxu0 0.0
        %1287 = vmatprep.subr.mxu0 0.0
        %1288 = vmatpush1.msra.mxu0 0.0
        %1289 = vmatprep.subr.mxu0 0.0
        %1290 = vmatpush1.msra.mxu0 0.0
        %1291 = vmatprep.subr.mxu0 0.0
        %1292 = vmatpush1.msra.mxu0 0.0
        %1293 = vmatprep.subr.mxu0 0.0
        %1294 = vmatpush1.msra.mxu0 0.0
        %1295 = vmatprep.subr.mxu0 0.0
        %1296 = vmatpush1.msra.mxu0 0.0
        %1297 = vmatprep.subr.mxu0 0.0
        %1298 = vmatpush1.msra.mxu0 0.0
        %1299 = vmatprep.mubr.f32.mxu0 0.0
        %1300 = vmatmul.mubr.f32.gmra.mrb[0].mxu0 %v1162
        %v1301 = vpop.f32.mrb[0].mxu0
        %v1302 = vadd.f32 %v1159, %v1301
        %v1303 = vpop.f32.mrb[0].mxu0
        %v1304 = vadd.f32 %v1159, %v1303
        %1305 = vdwg.mxu0
        %v1310 = vcombine.low %v1231, %v1233
        %v1311 = vcombine.low %v1302, %v1304
        %v1313 = vunpack.c.l.s4 1983009808
        %v1314 = vunpack.c.0.s8 %v1313
        %v1315 = vlaneseq
        %v1316 = vshrl.u32 %v1315, 7
        %v1317 = vsub.s32 %v1314, %v1316
        %v1318 = vrot.slane %v1310, %v1317
        %v1320 = vunpack.c.l.s4 1983009808
        %v1321 = vunpack.c.0.s8 %v1320
        %v1322 = vlaneseq
        %v1323 = vshrl.u32 %v1322, 7
        %v1324 = vsub.s32 %v1321, %v1323
        %v1325 = vrot.slane %v1311, %v1324
        %v1326 = vcombine.low %v1318, %v1325
        %1328 = vst [vmem:[%s270] sm:$0xff] %v1326
        %s1329 = sand.u32 %s181, 1
        %s1330 = scalar_lea.sflag [#allocation3], %s1329
        %s1331 = sand.u32 %s181, 1
        %s1332 = smul.addr %s1331, 8
        %s1333 = scalar_lea.vmem [#allocation2], %s1332
        // Predicated region
        $region49: #{tpu_custom_call.1} parent=47 // pred_check
          %p1334 = pneg %p191
        $region50: #{tpu_custom_call.1} parent=47 // pred_check_branch
          %1336 = sbr.rel (%p1334) target = $region52
        $region51: #{tpu_custom_call.1} parent=47 // pred_region
          %s1337 = smul.u32 4, %s21
          %s1339 = ssub.s32 128, 128
          %1340 = vsyncadd %s1330, %s1339
          %s1341 = smul.addr %s1337, 32
          %s1342 = scalar_lea.hbm %s7, %s1341
          %s1344 = sshll.u32 %s1333, 4
          %s1345 = int_to_ptr.vmem [resolvable:$true] %s1344
          %1347 = dma.vmem_to_hbm [thread:$0]  %s1345, 128, %s1342, %s1330
        $region52: #{tpu_custom_call.1} parent=47 // pred_fallthru
          _
      $region48: #{tpu_custom_call.1} parent=5 // pred_fallthru
        _
      %p1348 = scmp.le.s32.totalorder 2, %s16
      // Predicated region
      $region53: #{tpu_custom_call.1} parent=5 // pred_check
        %p1349 = pneg %p1348
      $region54: #{tpu_custom_call.1} parent=5 // pred_check_branch
        %1351 = sbr.rel (%p1349) target = $region56
      $region55: #{tpu_custom_call.1} parent=5 // pred_region
        %s1352 = ssub.s32 %s16, 2
        // Predicated region
        $region57: #{tpu_custom_call.1} parent=55 // pred_check
          %p1353 = pneg %p197
        $region58: #{tpu_custom_call.1} parent=55 // pred_check_branch
          %1355 = sbr.rel (%p1353) target = $region60
        $region59: #{tpu_custom_call.1} parent=55 // pred_region
          %s1356 = sand.u32 %s182, 1
          %s1357 = scalar_lea.sflag [#allocation3], %s1356
          %s1358 = sand.u32 %s182, 1
          %s1359 = smul.addr %s1358, 8
          %s1360 = scalar_lea.vmem [#allocation2], %s1359
          %1361 = dma.done %s1357, 128
        $region60: #{tpu_custom_call.1} parent=55 // pred_fallthru
          _
      $region56: #{tpu_custom_call.1} parent=5 // pred_fallthru
        _
    $region6: #{tpu_custom_call.1} parent=1 // loop_footer
      %s20 = sadd.s32 1, %s16
    $region7: #{tpu_custom_call.1} parent=1 // loop_footer_branch
      %15 = sbr.rel target = $region3
    $region8: #{tpu_custom_call.1} parent=1 // loop_exit
      _
    %1362 = vsyncpa [#allocation3], 1
    %s1363 = scalar_lea.sflag [#allocation3], 1
    %1364 = vsyncpa %s1363, 1

</llo_original>
